<compile_context>
chip_gen: v7x
topology: tpu7x:2x2x1
jax: 0.10.0
libtpu: 0.0.40
codegen_flags: <defaults>
</compile_context>

<pallas_src>
import math

import jax
import jax.numpy as jnp
import numpy as np
from jax.experimental import pallas as pl
from jax.experimental.pallas import tpu as pltpu

PI = 3.141592  # module-level constant used by the PyTorch code (not math.pi)

# ----------------------------- config (cfg.reshape.sph.*) -----------------------------
EPS = 1e-6
RADIUS = 1.0
SCALING = 1.0
DELTA = 1e-3
LOWERBOUND = True
ANGLE_TYPE = "half"      # 'half' -> (PI - 2*phi_L) * sigmoid(x) + phi_L


def build_params(num_features: int):
    """Deterministic construction of the module's buffers (mirrors __init__)."""
    D = num_features
    if LOWERBOUND:
        L = 0.01
        upper_bound = PI / 2.0 * (1.0 - L)
        phi_L = math.asin(DELTA ** (1.0 / D))
        phi_L = phi_L if phi_L < upper_bound else upper_bound
    else:
        phi_L = 0.0

    W_theta = np.eye(D, dtype=np.float32)                          # (D, D)
    W_theta = np.concatenate([W_theta, W_theta[-1:None]], axis=0)  # (D+1, D)

    W_phi = np.triu(np.ones((D + 1, D + 1), dtype=np.float32), k=1)
    W_phi[-2, -1] = 0.0

    b_phi = np.zeros((D + 1,), dtype=np.float32)
    b_phi[-1] = -PI / 2.0

    return dict(
        phi_L=np.float32(phi_L),
        W_theta=W_theta,
        W_phi=W_phi,
        b_phi=b_phi,
        scaling=np.float32(SCALING),
        radius=np.float32(RADIUS),
    )


# ----------------------------------- Pallas kernel ------------------------------------
def sph_kernel(x_ref, wpre_ref, scal_ref, o_ref):
    # scalars (SMEM): [half_scale, amp, offset, radius]
    half_scale = scal_ref[0]
    amp = scal_ref[1]
    offset = scal_ref[2]
    radius = scal_ref[3]

    x = x_ref[...].astype(jnp.float32)                    # (TB, D)

    # angularize('half'):  (PI - 2*phi_L) * sigmoid(scaling * x) + phi_L
    #                   == amp * tanh(half_scale * x) + offset
    # (one EUP tanh instead of exp + reciprocal)
    ang = amp * jnp.tanh(half_scale * x) + offset

    v_sin = jnp.sin(ang)                                  # (TB, D)
    v_cos = jnp.cos(ang)                                  # (TB, D)
    log_sin = jnp.log(jnp.abs(v_sin) + EPS)
    log_cos = jnp.log(jnp.abs(v_cos) + EPS)

    # Exclusive prefix sums of log_sin along features == log_sin @ triu(ones(D,D), 1).
    # This single DxD matmul replaces BOTH structured matmuls of the PyTorch
    # module (identity-with-duplicated-row W_theta and (D+1)^2 W_phi).
    prefix = jnp.dot(log_sin, wpre_ref[...], preferred_element_type=jnp.float32)

    # columns 0 .. D-1
    y_main = radius * jnp.exp(prefix + log_cos)
    y_main = jnp.where(v_cos < 0.0, -y_main, y_main)      # sign flip where cos < 0

    # last column: radius * prod_i (|sin(ang_i)| + eps); never sign-flipped
    y_last = radius * jnp.exp(prefix[:, -1:] + log_sin[:, -1:])

    d = x.shape[-1]
    o_ref[:, :d] = y_main.astype(o_ref.dtype)
    o_ref[:, d:] = y_last.astype(o_ref.dtype)


# ----------------------------------- tiling helpers ------------------------------------
def _round_up(n: int, m: int) -> int:
    return ((n + m - 1) // m) * m


def _pick_batch_tile(batch: int, d: int) -> int:
    """Batch tile: large enough to amortize the ~0.35us grid-step overhead and
    feed the MXU/store path, small enough that double-buffered x/out blocks
    stay comfortably inside VMEM, and (for big batches) >= 2 tiles so the
    'parallel' grid axis shards across both v7x TensorCores."""
    # Cap so a single f32 x-block is <= ~2 MiB.
    cap = max(8, min(512, ((2 * 1024 * 1024) // (4 * max(d, 1))) // 8 * 8))
    if batch <= cap and batch <= 128:
        return batch                              # one full-extent block, no pad rows
    if batch <= cap:
        return _round_up((batch + 1) // 2, 8)     # >= 2 tiles for megacore
    return cap


# ------------------------------------- wrapper ------------------------------------------
def sph_no_grad_forward(x, params):
    """Full forward: flatten(1) then spherize via the Pallas kernel."""
    B = x.shape[0]
    x2d = x.reshape(B, -1)                        # keep input dtype; cast in-kernel
    D = x2d.shape[1]

    # DxD strict-upper-triangular ones (top-left block of W_phi) -> prefix-sum matmul.
    w_prefix = jnp.asarray(params["W_phi"][:D, :D], dtype=jnp.float32)

    phi_L = float(params["phi_L"])
    scaling = float(params["scaling"])
    radius = float(params["radius"])
    span = (PI - 2.0 * phi_L) if ANGLE_TYPE == "half" else (PI / 2.0 - phi_L)
    scalars = jnp.asarray(
        [0.5 * scaling, 0.5 * span, 0.5 * span + phi_L, radius], dtype=jnp.float32
    )

    TB = _pick_batch_tile(B, D)
    grid = (pl.cdiv(B, TB),)

    # Resident weight + double-buffered x/out blocks, with headroom; stay above
    # the v5e 16 MiB scoped default and below v7x's 64 MiB physical VMEM.
    vmem_bytes = 4 * (D * D + 2 * TB * D + 2 * TB * (D + 1)) + (8 << 20)
    vmem_limit = int(min(64 << 20, max(vmem_bytes, 32 << 20)))

    cost = pl.CostEstimate(
        flops=int(2 * B * D * D + 12 * B * D),
        transcendentals=int(6 * B * D + B),
        bytes_accessed=int(4 * (B * D + B * (D + 1) + D * D)),
    )

    out = pl.pallas_call(
        sph_kernel,
        out_shape=jax.ShapeDtypeStruct((B, D + 1), jnp.float32),
        grid=grid,
        in_specs=[
            pl.BlockSpec((TB, D), lambda i: (i, 0)),
            pl.BlockSpec((D, D), lambda i: (0, 0)),          # resident constant weight
            pl.BlockSpec(memory_space=pltpu.MemorySpace.SMEM),
        ],
        out_specs=pl.BlockSpec((TB, D + 1), lambda i: (i, 0)),
        compiler_params=pltpu.CompilerParams(
            dimension_semantics=("parallel",),
            vmem_limit_bytes=vmem_limit,
        ),
        cost_estimate=cost,
    )(x2d, w_prefix, scalars)

    return out


# -------------------------------- pure-JAX reference -----------------------------------
def sph_no_grad_reference(x, params):
    """Faithful transcription of SphNoGrad.forward (sigmoid + full matmuls)."""
    B = x.shape[0]
    x2 = x.reshape(B, -1).astype(jnp.float32)
    scaling = params["scaling"]
    radius = params["radius"]
    phi_L = params["phi_L"]
    x2 = scaling * x2
    if ANGLE_TYPE == "half":
        ang = (PI - 2.0 * phi_L) * jax.nn.sigmoid(x2) + phi_L
    else:
        ang = (PI / 2.0 - phi_L) * jax.nn.sigmoid(x2) + phi_L
    xt = ang @ jnp.asarray(params["W_theta"]).T
    v_sin = jnp.sin(xt)
    v_cos = jnp.cos(xt + jnp.asarray(params["b_phi"]))
    y = jnp.log(jnp.abs(v_sin) + EPS) @ jnp.asarray(params["W_phi"]) + jnp.log(
        jnp.abs(v_cos) + EPS
    )
    y = radius * jnp.exp(y)
    sign = jnp.where(v_cos < 0.0, -1.0, 1.0)
    sign = sign.at[:, -1].set(1.0)
    return sign * y


if __name__ == "__main__":
    key = jax.random.PRNGKey(0)
    # NCHW input (B=2, C=4, H=4, W=2) -> flatten(1) -> (2, 32), num_features = 32
    x = jax.random.normal(key, (2, 4, 4, 2), dtype=jnp.float32)
    num_features = int(np.prod(x.shape[1:]))

    params = build_params(num_features)

    out = sph_no_grad_forward(x, params)
    out = jax.block_until_ready(out)

    ref = sph_no_grad_reference(x, params)
    np.testing.assert_allclose(np.asarray(out), np.asarray(ref), rtol=1e-5, atol=1e-5)

    print("KERNEL_OK")
</pallas_src>

<mosaic_0001>
module attributes {stable_mosaic.version = 11 : i64} {
  func.func @sph_kernel(%arg0: i32, %arg1: memref<2x32xf32, #tpu.memory_space<vmem>>, %arg2: memref<32x32xf32, #tpu.memory_space<vmem>>, %arg3: memref<4xf32, #tpu.memory_space<smem>>, %arg4: memref<2x33xf32, #tpu.memory_space<vmem>>) attributes {dimension_semantics = [#tpu.dimension_semantics<parallel>], iteration_bounds = array<i64: 1>, scalar_prefetch = 0 : i64, scratch_operands = 0 : i64, tpu.core_type = #tpu.core_type<tc>, window_params = [{transform_indices = @transform_0, window_bounds = array<i64: 2, 32>}, {pipeline_mode = #tpu.pipeline_mode<synchronous>, transform_indices = @transform_1, window_bounds = array<i64: 32, 32>}, {transform_indices = @transform_2, window_bounds = array<i64: 4>}, {transform_indices = @transform_3, window_bounds = array<i64: 2, 33>}]} {
    %c0 = arith.constant 0 : index
    %0 = memref.load %arg3[%c0] : memref<4xf32, #tpu.memory_space<smem>>
    %c1 = arith.constant 1 : index
    %1 = memref.load %arg3[%c1] : memref<4xf32, #tpu.memory_space<smem>>
    %c2 = arith.constant 2 : index
    %2 = memref.load %arg3[%c2] : memref<4xf32, #tpu.memory_space<smem>>
    %c3 = arith.constant 3 : index
    %3 = memref.load %arg3[%c3] : memref<4xf32, #tpu.memory_space<smem>>
    %c0_0 = arith.constant 0 : index
    %c0_1 = arith.constant 0 : index
    %4 = vector.load %arg1[%c0_0, %c0_1] : memref<2x32xf32, #tpu.memory_space<vmem>>, vector<2x32xf32>
    %5 = vector.broadcast %0 : f32 to vector<2x32xf32>
    %6 = arith.mulf %5, %4 : vector<2x32xf32>
    %7 = math.tanh %6 : vector<2x32xf32>
    %8 = vector.broadcast %1 : f32 to vector<2x32xf32>
    %9 = arith.mulf %8, %7 : vector<2x32xf32>
    %10 = vector.broadcast %2 : f32 to vector<2x32xf32>
    %11 = arith.addf %9, %10 : vector<2x32xf32>
    %12 = math.sin %11 : vector<2x32xf32>
    %13 = math.cos %11 : vector<2x32xf32>
    %14 = math.absf %12 : vector<2x32xf32>
    %cst = arith.constant 9.99999997E-7 : f32
    %15 = vector.broadcast %cst : f32 to vector<2x32xf32>
    %16 = arith.addf %14, %15 : vector<2x32xf32>
    %17 = math.log %16 : vector<2x32xf32>
    %18 = math.absf %13 : vector<2x32xf32>
    %cst_2 = arith.constant 9.99999997E-7 : f32
    %19 = vector.broadcast %cst_2 : f32 to vector<2x32xf32>
    %20 = arith.addf %18, %19 : vector<2x32xf32>
    %21 = math.log %20 : vector<2x32xf32>
    %c0_3 = arith.constant 0 : index
    %c0_4 = arith.constant 0 : index
    %22 = vector.load %arg2[%c0_3, %c0_4] : memref<32x32xf32, #tpu.memory_space<vmem>>, vector<32x32xf32>
    %cst_5 = arith.constant dense<0.000000e+00> : vector<2x32xf32>
    %23 = tpu.matmul %17, %22, %cst_5 {dimension_numbers = #tpu.dot_dimension_numbers<[1], [0], [0], [1], [0, 0, 1, 1], [], []>} : vector<2x32xf32>, vector<32x32xf32>, vector<2x32xf32> -> vector<2x32xf32>
    %24 = arith.addf %23, %21 : vector<2x32xf32>
    %25 = math.exp %24 : vector<2x32xf32>
    %26 = vector.broadcast %3 : f32 to vector<2x32xf32>
    %27 = arith.mulf %26, %25 : vector<2x32xf32>
    %cst_6 = arith.constant 0.000000e+00 : f32
    %28 = vector.broadcast %cst_6 : f32 to vector<2x32xf32>
    %29 = arith.cmpf olt, %13, %28 : vector<2x32xf32>
    %cst_7 = arith.constant 0.000000e+00 : f32
    %30 = vector.broadcast %cst_7 : f32 to vector<2x32xf32>
    %31 = arith.subf %30, %27 : vector<2x32xf32>
    %32 = arith.select %29, %31, %27 : vector<2x32xi1>, vector<2x32xf32>
    %33 = vector.extract_strided_slice %23 {offsets = [0, 31], sizes = [2, 1], strides = [1, 1]} : vector<2x32xf32> to vector<2x1xf32>
    %34 = vector.extract_strided_slice %17 {offsets = [0, 31], sizes = [2, 1], strides = [1, 1]} : vector<2x32xf32> to vector<2x1xf32>
    %35 = arith.addf %33, %34 : vector<2x1xf32>
    %36 = math.exp %35 : vector<2x1xf32>
    %37 = vector.broadcast %3 : f32 to vector<2x1xf32>
    %38 = arith.mulf %37, %36 : vector<2x1xf32>
    %c0_8 = arith.constant 0 : index
    %c0_9 = arith.constant 0 : index
    %39 = vector.load %arg4[%c0_8, %c0_9] : memref<2x33xf32, #tpu.memory_space<vmem>>, vector<2x32xf32>
    tpu.vector_store %arg4[%c0_8, %c0_9], %32 {strides = array<i32>} : memref<2x33xf32, #tpu.memory_space<vmem>>, vector<2x32xf32>,
    %c0_10 = arith.constant 0 : index
    %c32 = arith.constant 32 : index
    %40 = vector.load %arg4[%c0_10, %c32] : memref<2x33xf32, #tpu.memory_space<vmem>>, vector<2x1xf32>
    tpu.vector_store %arg4[%c0_10, %c32], %38 {strides = array<i32>} : memref<2x33xf32, #tpu.memory_space<vmem>>, vector<2x1xf32>,
    return
  }
  func.func @transform_0(%arg0: i32) -> (i32, i32) {
    %c0_i32 = arith.constant 0 : i32
    %c0_i32_0 = arith.constant 0 : i32
    return %arg0, %c0_i32 : i32, i32
  }
  func.func @transform_1(%arg0: i32) -> (i32, i32) {
    %c0_i32 = arith.constant 0 : i32
    %c0_i32_0 = arith.constant 0 : i32
    %c0_i32_1 = arith.constant 0 : i32
    return %c0_i32, %c0_i32_0 : i32, i32
  }
  func.func @transform_2(%arg0: i32) -> i32 {
    %c0_i32 = arith.constant 0 : i32
    %c0_i32_0 = arith.constant 0 : i32
    return %c0_i32 : i32
  }
  func.func @transform_3(%arg0: i32) -> (i32, i32) {
    %c0_i32 = arith.constant 0 : i32
    %c0_i32_0 = arith.constant 0 : i32
    return %arg0, %c0_i32 : i32, i32
  }
}

</mosaic_0001>

<llo_original>
// kernel: tpu_custom_call.1
$region0: #{tpu_custom_call.1}
  #allocation0 [shape = 'u32[]', space=smem, size = 0x4, offset = 0x4, fixed_abs, tag = 'smem constant byte address 0x4 - core index']
  #allocation1 [shape = 'u32[144,128]{1,0:T(1,128)}', space=vmem, size = 0x12000, scoped, tag = 'internal scratch']
  %s0 = inlined_call_operand.hbm [shape: f32[2,32], index: 0, kind: input, shape index: {}]
  %s1 = inlined_call_operand.hbm [shape: f32[32,32], index: 1, kind: input, shape index: {}]
  %s2 = inlined_call_operand.vmem [shape: f32[4], index: 2, kind: input, shape index: {}]
  %s3 = inlined_call_operand.hbm [shape: f32[2,33], index: 3, kind: output, shape index: {}]
  %s4 = sld [smem:[#allocation0]]
  $region34: #{tpu_custom_call.1} parent=0
    _
  %s6 = ssub.s32 1, %s4
  %s7 = scalar_select 0, %s6, %s4
  $region1: #{tpu_custom_call.1} parent=0
    #allocation2 [shape = 'u8[1024]{0}', space=vmem, size = 0x400, scoped, tag = 'input window, operand 0, single buffered']
    #allocation3 [shape = 's32[1]{0}', space=sflag, size = 0x4, scoped, tag = 'scoped memory for tpu_custom_call.1']
    #allocation4 [shape = 's32[1]{0}', space=sflag, size = 0x4, scoped, tag = 'scoped memory for tpu_custom_call.1']
    #allocation5 [shape = 's32[1]{0}', space=sflag, size = 0x4, scoped, tag = 'scoped memory for tpu_custom_call.1']
    #allocation6 [shape = 'u8[16384]{0}', space=vmem, size = 0x4000, scoped, tag = 'input window, operand 1, single buffered']
    #allocation7 [shape = 's32[1]{0}', space=sflag, size = 0x4, scoped, tag = 'scoped memory for tpu_custom_call.1']
    #allocation8 [shape = 'u8[512]{0}', space=smem, size = 0x200, scoped, tag = 'input window, operand 2, single buffered']
    #allocation9 [shape = 'u8[1024]{0}', space=vmem, size = 0x400, scoped, tag = 'output window, operand 0, single buffered']
    %8 = vsyncpa [#allocation3], 0
    %9 = vsyncpa [#allocation7], 0
    %10 = vsyncpa [#allocation5], 0
    %11 = vsyncpa [#allocation4], 0
    // Predicated region
    $region2: #{tpu_custom_call.1} parent=1 // pred_check
      _
    $region3: #{tpu_custom_call.1} parent=1 // pred_check_branch
      %13 = sbr.rel (0) target = $region5
    $region4: #{tpu_custom_call.1} parent=1 // pred_region
      %s15 = ssub.s32 32, 32
      %16 = vsyncadd [#allocation3], %s15
      %s18 = sshll.u32 [#allocation2], 4
      %s19 = int_to_ptr.vmem [resolvable:$true] %s18
      %21 = dma.hbm_to_vmem [thread:$0]  %s0, 32, %s19, [#allocation3]
    $region5: #{tpu_custom_call.1} parent=1 // pred_fallthru
      _
    // Predicated region
    $region6: #{tpu_custom_call.1} parent=1 // pred_check
      _
    $region7: #{tpu_custom_call.1} parent=1 // pred_check_branch
      %23 = sbr.rel (0) target = $region9
    $region8: #{tpu_custom_call.1} parent=1 // pred_region
      %s25 = ssub.s32 512, 512
      %26 = vsyncadd [#allocation7], %s25
      %s27 = sshll.u32 [#allocation6], 4
      %s28 = int_to_ptr.vmem [resolvable:$true] %s27
      %33 = dma.hbm_to_vmem [thread:$0]  %s1, 512, %s28, [#allocation7], 128, 128, 8
    $region9: #{tpu_custom_call.1} parent=1 // pred_fallthru
      _
    // Predicated region
    $region10: #{tpu_custom_call.1} parent=1 // pred_check
      _
    $region11: #{tpu_custom_call.1} parent=1 // pred_check_branch
      %35 = sbr.rel (0) target = $region13
    $region12: #{tpu_custom_call.1} parent=1 // pred_region
      %s37 = ssub.s32 16, 16
      %38 = vsyncadd [#allocation5], %s37
      %s40 = sshll.u32 %s2, 4
      %s41 = int_to_ptr.vmem [resolvable:$true] %s40
      %43 = dma.vmem_to_smem %s41, 16, [#allocation8], [#allocation5]
    $region13: #{tpu_custom_call.1} parent=1 // pred_fallthru
      _
    // Predicated region
    $region14: #{tpu_custom_call.1} parent=1 // pred_check
      _
    $region15: #{tpu_custom_call.1} parent=1 // pred_check_branch
      %45 = sbr.rel (0) target = $region17
    $region16: #{tpu_custom_call.1} parent=1 // pred_region
      %46 = dma.done [#allocation3], 32
    $region17: #{tpu_custom_call.1} parent=1 // pred_fallthru
      _
    // Predicated region
    $region18: #{tpu_custom_call.1} parent=1 // pred_check
      _
    $region19: #{tpu_custom_call.1} parent=1 // pred_check_branch
      %48 = sbr.rel (0) target = $region21
    $region20: #{tpu_custom_call.1} parent=1 // pred_region
      %49 = dma.done [#allocation7], 512
    $region21: #{tpu_custom_call.1} parent=1 // pred_fallthru
      _
    // Predicated region
    $region22: #{tpu_custom_call.1} parent=1 // pred_check
      _
    $region23: #{tpu_custom_call.1} parent=1 // pred_check_branch
      %51 = sbr.rel (0) target = $region25
    $region24: #{tpu_custom_call.1} parent=1 // pred_region
      %52 = dma.done [#allocation5], 16
    $region25: #{tpu_custom_call.1} parent=1 // pred_fallthru
      _
    %53 = sfence
    %s54 = sld [smem:[#allocation8]]
    %s55 = sld [smem:[#allocation8 + $0x1]]
    %s56 = sld [smem:[#allocation8 + $0x2]]
    %s57 = sld [smem:[#allocation8 + $0x3]]
    %v58 = vld [vmem:[#allocation2] sm:$0x3]
    %v59 = vstv %s54
    %v60 = vmul.f32 %v59, %v58
    %v61 = vtanh.pop %v60
    %v62 = vstv %s55
    %v63 = vmul.f32 %v62, %v61
    %v64 = vstv %s56
    %v65 = vadd.f32 %v63, %v64
    %v66 = vand.u32 2147483647, %v65
    %vm67 = vcmp.le.f32.partialorder %v66, 0.7853982
    %vm68 = vcmp.lt.s32.totalorder %v65, 0
    %v69 = vand.u32 %v65, 2139095040
    %v70 = vshrl.u32 %v69, 23
    %v71 = vsub.s32 %v70, 127
    %v72 = vand.u32 2147483647, %v65
    %v73 = vand.u32 %v72, 8388607
    %v74 = vor.u32 %v73, 8388608
    %v75 = vsub.s32 0, %v74
    %v76 = vadd.s32 %v71, 1
    %vm77 = vcmp.gt.s32.totalorder %v76, 0
    %v78 = vsel %vm77, %v76, 0
    %v79 = vshrl.u32 %v78, 5
    %v80 = vand.u32 %v78, 31
    %v81 = vsub.s32 32, %v80
    %v82 = vshrl.u32 683565275, %v81
    %v83 = vshll.u32 683565275, %v80
    %v84 = vshrl.u32 2475754826, %v81
    %v85 = vor.u32 %v83, %v84
    %v86 = vshll.u32 2475754826, %v80
    %v87 = vshrl.u32 2131351028, %v81
    %v88 = vor.u32 %v86, %v87
    %v89 = vshll.u32 2131351028, %v80
    %v90 = vshrl.u32 2102212464, %v81
    %v91 = vor.u32 %v89, %v90
    %v92 = vshll.u32 2102212464, %v80
    %v93 = vshrl.u32 920167782, %v81
    %v94 = vor.u32 %v92, %v93
    %v95 = vshll.u32 920167782, %v80
    %v96 = vshrl.u32 1326507024, %v81
    %v97 = vor.u32 %v95, %v96
    %vm98 = vcmp.lt.s32.totalorder %v79, 1
    %vm99 = vcmp.lt.s32.totalorder %v79, 2
    %vm100 = vcmp.lt.s32.totalorder %v79, 3
    %vm101 = vcmp.lt.s32.totalorder %v79, 4
    %v102 = vsel %vm98, %v82, %v85
    %v103 = vsel %vm101, %v91, 2102212464
    %v104 = vsel %vm100, %v88, %v103
    %v105 = vsel %vm99, %v102, %v104
    %v106 = vsel %vm98, %v85, %v88
    %v107 = vsel %vm101, %v94, 920167782
    %v108 = vsel %vm100, %v91, %v107
    %v109 = vsel %vm99, %v106, %v108
    %v110 = vsel %vm98, %v88, %v91
    %v111 = vsel %vm101, %v97, 1326507024
    %v112 = vsel %vm100, %v94, %v111
    %v113 = vsel %vm99, %v110, %v112
    %v114 = vshll.u32 %v74, 8
    %v115 = vmul.u32.u64.compose %v114, %v113
    %v116 = vextract.low.u32 %v115
    %v117 = vextract.high.u32 %v115
    %v118 = vmul.u32.u64.compose %v114, %v109
    %v119 = vextract.low.u32 %v118
    %v120 = vextract.high.u32 %v118
    %v121 = vmul.u32 %v114, %v105
    %v122 = vadd.s32 %v117, %v119
    %vm123 = vc.u32 %v117, %v119
    %v124 = vadd.s32 %v120, 1
    %v125 = vsel %vm123, %v124, %v120
    %v126 = vadd.s32 %v121, %v125
    %v127 = vadd.s32 %v126, 536870912
    %v128 = vshrl.u32 %v127, 30
    %v129 = vshll.u32 %v128, 30
    %v130 = vsub.s32 %v126, %v129
    %vm131 = vcmp.lt.s32.totalorder %v130, 0
    %v132 = vsub.s32 0, %v130
    %v133 = vsel %vm131, %v132, %v130
    %v134 = vclz %v133
    %v135 = vsub.s32 %v134, 2
    %vm136 = vcmp.gt.s32.totalorder 0, %v135
    %v137 = vsel %vm136, 0, %v135
    %v138 = vsub.s32 32, %v137
    %v139 = vshll.u32 %v130, %v137
    %v140 = vshrl.u32 %v122, %v138
    %v141 = vor.u32 %v139, %v140
    %v142 = vsub.s32 4294967266, %v137
    %v143 = vadd.s32 %v142, 127
    %v144 = vshll.u32 %v143, 23
    %v145 = vor.u32 4788187, %v144
    %v146 = vand.u32 2147483647, %v145
    %v148 = vcvt.s32.f32 %v141
    %v149 = vmul.f32 %v148, %v146
    %v150 = vxor.u32 %v149, 2147483648
    %v151 = vsel %vm68, %v150, %v149
    %v152 = vsub.s32 4, %v128
    %v153 = vsel %vm68, %v152, %v128
    %v154 = vsel %vm67, %v65, %v151
    %v155 = vsel %vm67, 0, %v153
    %v156 = vcosq.f32.pop %v154
    %v157 = vsinq.f32.pop %v154
    %vm158 = vweird.f32 %v65
    %v159 = vadd.s32 %v155, 3
    %v160 = vand.u32 %v159, 3
    %vm161 = vcmp.lt.s32.totalorder %v160, 2
    %vm162 = vcmp.eq.s32.totalorder %v160, 0
    %v163 = vxor.u32 %v157, 2147483648
    %v164 = vsel %vm162, %v156, %v163
    %vm165 = vcmp.eq.s32.totalorder %v160, 2
    %v166 = vxor.u32 %v156, 2147483648
    %v167 = vsel %vm165, %v166, %v157
    %v168 = vsel %vm161, %v164, %v167
    %v169 = vsel %vm158, nan, %v168
    %v170 = vand.u32 2147483647, %v65
    %vm171 = vcmp.le.f32.partialorder %v170, 0.7853982
    %vm172 = vcmp.lt.s32.totalorder %v65, 0
    %v173 = vand.u32 %v65, 2139095040
    %v174 = vshrl.u32 %v173, 23
    %v175 = vsub.s32 %v174, 127
    %v176 = vand.u32 2147483647, %v65
    %v177 = vand.u32 %v176, 8388607
    %v178 = vor.u32 %v177, 8388608
    %v179 = vsub.s32 0, %v178
    %v180 = vadd.s32 %v175, 1
    %vm181 = vcmp.gt.s32.totalorder %v180, 0
    %v182 = vsel %vm181, %v180, 0
    %v183 = vshrl.u32 %v182, 5
    %v184 = vand.u32 %v182, 31
    %v185 = vsub.s32 32, %v184
    %v186 = vshrl.u32 683565275, %v185
    %v187 = vshll.u32 683565275, %v184
    %v188 = vshrl.u32 2475754826, %v185
    %v189 = vor.u32 %v187, %v188
    %v190 = vshll.u32 2475754826, %v184
    %v191 = vshrl.u32 2131351028, %v185
    %v192 = vor.u32 %v190, %v191
    %v193 = vshll.u32 2131351028, %v184
    %v194 = vshrl.u32 2102212464, %v185
    %v195 = vor.u32 %v193, %v194
    %v196 = vshll.u32 2102212464, %v184
    %v197 = vshrl.u32 920167782, %v185
    %v198 = vor.u32 %v196, %v197
    %v199 = vshll.u32 920167782, %v184
    %v200 = vshrl.u32 1326507024, %v185
    %v201 = vor.u32 %v199, %v200
    %vm202 = vcmp.lt.s32.totalorder %v183, 1
    %vm203 = vcmp.lt.s32.totalorder %v183, 2
    %vm204 = vcmp.lt.s32.totalorder %v183, 3
    %vm205 = vcmp.lt.s32.totalorder %v183, 4
    %v206 = vsel %vm202, %v186, %v189
    %v207 = vsel %vm205, %v195, 2102212464
    %v208 = vsel %vm204, %v192, %v207
    %v209 = vsel %vm203, %v206, %v208
    %v210 = vsel %vm202, %v189, %v192
    %v211 = vsel %vm205, %v198, 920167782
    %v212 = vsel %vm204, %v195, %v211
    %v213 = vsel %vm203, %v210, %v212
    %v214 = vsel %vm202, %v192, %v195
    %v215 = vsel %vm205, %v201, 1326507024
    %v216 = vsel %vm204, %v198, %v215
    %v217 = vsel %vm203, %v214, %v216
    %v218 = vshll.u32 %v178, 8
    %v219 = vmul.u32.u64.compose %v218, %v217
    %v220 = vextract.low.u32 %v219
    %v221 = vextract.high.u32 %v219
    %v222 = vmul.u32.u64.compose %v218, %v213
    %v223 = vextract.low.u32 %v222
    %v224 = vextract.high.u32 %v222
    %v225 = vmul.u32 %v218, %v209
    %v226 = vadd.s32 %v221, %v223
    %vm227 = vc.u32 %v221, %v223
    %v228 = vadd.s32 %v224, 1
    %v229 = vsel %vm227, %v228, %v224
    %v230 = vadd.s32 %v225, %v229
    %v231 = vadd.s32 %v230, 536870912
    %v232 = vshrl.u32 %v231, 30
    %v233 = vshll.u32 %v232, 30
    %v234 = vsub.s32 %v230, %v233
    %vm235 = vcmp.lt.s32.totalorder %v234, 0
    %v236 = vsub.s32 0, %v234
    %v237 = vsel %vm235, %v236, %v234
    %v238 = vclz %v237
    %v239 = vsub.s32 %v238, 2
    %vm240 = vcmp.gt.s32.totalorder 0, %v239
    %v241 = vsel %vm240, 0, %v239
    %v242 = vsub.s32 32, %v241
    %v243 = vshll.u32 %v234, %v241
    %v244 = vshrl.u32 %v226, %v242
    %v245 = vor.u32 %v243, %v244
    %v246 = vsub.s32 4294967266, %v241
    %v247 = vadd.s32 %v246, 127
    %v248 = vshll.u32 %v247, 23
    %v249 = vor.u32 4788187, %v248
    %v250 = vand.u32 2147483647, %v249
    %v252 = vcvt.s32.f32 %v245
    %v253 = vmul.f32 %v252, %v250
    %v254 = vxor.u32 %v253, 2147483648
    %v255 = vsel %vm172, %v254, %v253
    %v256 = vsub.s32 4, %v232
    %v257 = vsel %vm172, %v256, %v232
    %v258 = vsel %vm171, %v65, %v255
    %v259 = vsel %vm171, 0, %v257
    %v260 = vcosq.f32.pop %v258
    %v261 = vsinq.f32.pop %v258
    %vm262 = vweird.f32 %v65
    %v263 = vand.u32 %v259, 3
    %vm264 = vcmp.lt.s32.totalorder %v263, 2
    %vm265 = vcmp.eq.s32.totalorder %v263, 0
    %v266 = vxor.u32 %v261, 2147483648
    %v267 = vsel %vm265, %v260, %v266
    %vm268 = vcmp.eq.s32.totalorder %v263, 2
    %v269 = vxor.u32 %v260, 2147483648
    %v270 = vsel %vm268, %v269, %v261
    %v271 = vsel %vm264, %v267, %v270
    %v272 = vsel %vm262, nan, %v271
    %v273 = vand.u32 2147483647, %v169
    %v274 = vadd.f32 %v273, 1e-06
    %v275 = vlog2.pop %v274
    %v276 = vmul.f32 %v275, 0.6931472
    %v277 = vand.u32 2147483647, %v272
    %v278 = vadd.f32 %v277, 1e-06
    %v279 = vlog2.pop %v278
    %v280 = vmul.f32 %v279, 0.6931472
    %v281 = vld [vmem:[#allocation6] sm:$0xff]
    %v282 = vld [vmem:[#allocation6 + $0x8] sm:$0xff]
    %v283 = vld [vmem:[#allocation6 + $0x10] sm:$0xff]
    %v284 = vld [vmem:[#allocation6 + $0x18] sm:$0xff]
    %vm285 = vcmask 261120
    %v287 = vsel %vm285, %v276, 0
    %289 = vmatprep.subr.mxu0 0.0
    %290 = vmatpush1.msra.mxu0 %v281
    %291 = vmatprep.subr.mxu0 0.0
    %292 = vmatpush1.msra.mxu0 %v282
    %293 = vmatprep.subr.mxu0 0.0
    %294 = vmatpush1.msra.mxu0 %v283
    %295 = vmatprep.subr.mxu0 0.0
    %296 = vmatpush1.msra.mxu0 %v284
    %297 = vmatprep.subr.mxu0 0.0
    %298 = vmatpush1.msra.mxu0 0.0
    %299 = vmatprep.subr.mxu0 0.0
    %300 = vmatpush1.msra.mxu0 0.0
    %301 = vmatprep.subr.mxu0 0.0
    %302 = vmatpush1.msra.mxu0 0.0
    %303 = vmatprep.subr.mxu0 0.0
    %304 = vmatpush1.msra.mxu0 0.0
    %305 = vmatprep.subr.mxu0 0.0
    %306 = vmatpush1.msra.mxu0 0.0
    %307 = vmatprep.subr.mxu0 0.0
    %308 = vmatpush1.msra.mxu0 0.0
    %309 = vmatprep.subr.mxu0 0.0
    %310 = vmatpush1.msra.mxu0 0.0
    %311 = vmatprep.subr.mxu0 0.0
    %312 = vmatpush1.msra.mxu0 0.0
    %313 = vmatprep.subr.mxu0 0.0
    %314 = vmatpush1.msra.mxu0 0.0
    %315 = vmatprep.subr.mxu0 0.0
    %316 = vmatpush1.msra.mxu0 0.0
    %317 = vmatprep.subr.mxu0 0.0
    %318 = vmatpush1.msra.mxu0 0.0
    %319 = vmatprep.subr.mxu0 0.0
    %320 = vmatpush1.msra.mxu0 0.0
    %321 = vmatprep.subr.mxu0 0.0
    %322 = vmatpush1.msra.mxu0 0.0
    %323 = vmatprep.subr.mxu0 0.0
    %324 = vmatpush1.msra.mxu0 0.0
    %325 = vmatprep.subr.mxu0 0.0
    %326 = vmatpush1.msra.mxu0 0.0
    %327 = vmatprep.subr.mxu0 0.0
    %328 = vmatpush1.msra.mxu0 0.0
    %329 = vmatprep.subr.mxu0 0.0
    %330 = vmatpush1.msra.mxu0 0.0
    %331 = vmatprep.subr.mxu0 0.0
    %332 = vmatpush1.msra.mxu0 0.0
    %333 = vmatprep.subr.mxu0 0.0
    %334 = vmatpush1.msra.mxu0 0.0
    %335 = vmatprep.subr.mxu0 0.0
    %336 = vmatpush1.msra.mxu0 0.0
    %337 = vmatprep.subr.mxu0 0.0
    %338 = vmatpush1.msra.mxu0 0.0
    %339 = vmatprep.subr.mxu0 0.0
    %340 = vmatpush1.msra.mxu0 0.0
    %341 = vmatprep.subr.mxu0 0.0
    %342 = vmatpush1.msra.mxu0 0.0
    %343 = vmatprep.subr.mxu0 0.0
    %344 = vmatpush1.msra.mxu0 0.0
    %345 = vmatprep.subr.mxu0 0.0
    %346 = vmatpush1.msra.mxu0 0.0
    %347 = vmatprep.subr.mxu0 0.0
    %348 = vmatpush1.msra.mxu0 0.0
    %349 = vmatprep.subr.mxu0 0.0
    %350 = vmatpush1.msra.mxu0 0.0
    %351 = vmatprep.subr.mxu0 0.0
    %352 = vmatpush1.msra.mxu0 0.0
    %353 = vmatprep.mubr.f32.mxu0 0.0
    %354 = vmatmul.mubr.f32.gmra.mrb[0].mxu0 %v287
    %v355 = vpop.f32.mrb[0].mxu0
    %v356 = vadd.f32 0.0, %v355
    %v357 = vpop.f32.mrb[0].mxu0
    %358 = vdwg.mxu0
    %v359 = vadd.f32 %v356, %v280
    %v360 = vmul.f32 %v359, 1.442695
    %v361 = vpow.pop %v360
    %v362 = vstv %s57
    %v363 = vmul.f32 %v362, %v361
    %vm364 = vcmp.lt.f32.partialorder %v272, 0.0
    %v365 = vsub.f32 0.0, %v363
    %v366 = vsel %vm364, %v365, %v363
    %v367 = vadd.f32 %v356, %v276
    %v368 = vmul.f32 %v367, 1.442695
    %v369 = vpow.pop %v368
    %v370 = vmul.f32 %v362, %v369
    %vm371 = vcmask 254976
    %372 = vst.msk [vmem:[#allocation9] sm:$0x3] %vm371, %v366
    %374 = vrot.lane.b32.xlu0 %v370, 1
    %v375 = vpop.permute.xlu0 %374
    %vm377 = vcmask 263424
    %378 = vst.msk [vmem:[#allocation9] sm:$0x3] %vm377, %v375
    // Predicated region
    $region26: #{tpu_custom_call.1} parent=1 // pred_check
      _
    $region27: #{tpu_custom_call.1} parent=1 // pred_check_branch
      %380 = sbr.rel (0) target = $region29
    $region28: #{tpu_custom_call.1} parent=1 // pred_region
      %s382 = ssub.s32 32, 32
      %383 = vsyncadd [#allocation4], %s382
      %s385 = sshll.u32 [#allocation9], 4
      %s386 = int_to_ptr.vmem [resolvable:$true] %s385
      %388 = dma.vmem_to_hbm [thread:$0]  %s386, 32, %s3, [#allocation4]
    $region29: #{tpu_custom_call.1} parent=1 // pred_fallthru
      _
    // Predicated region
    $region30: #{tpu_custom_call.1} parent=1 // pred_check
      _
    $region31: #{tpu_custom_call.1} parent=1 // pred_check_branch
      %390 = sbr.rel (0) target = $region33
    $region32: #{tpu_custom_call.1} parent=1 // pred_region
      %391 = dma.done [#allocation4], 32
    $region33: #{tpu_custom_call.1} parent=1 // pred_fallthru
      _
    %392 = vsyncpa [#allocation3], 1
    %393 = vsyncpa [#allocation7], 1
    %394 = vsyncpa [#allocation4], 1
    %395 = vsyncpa [#allocation5], 1

</llo_original>
